<compile_context>
chip_gen: v7x
topology: tpu7x:2x2x1
jax: 0.10.0
libtpu: 0.0.40
codegen_flags: <defaults>
</compile_context>

<pallas_src>
import functools

import jax
import jax.numpy as jnp
from jax.experimental import pallas as pl
from jax.experimental.pallas import tpu as pltpu

LANE = 128          # lane width (last dim)
BF16_SUBLANE = 16   # bf16 vreg is [16,128]; minimum clean row tile for bf16 LHS


def _round_up(x, m):
    return ((x + m - 1) // m) * m


def _cdiv(a, b):
    return (a + b - 1) // b


@functools.lru_cache(maxsize=1)
def _vmem_budget_bytes():
    """~85% of physical VMEM (generation-aware), conservative fallback."""
    try:
        cap = int(pltpu.get_tpu_info().vmem_capacity_bytes)
    except Exception:
        kind = ""
        try:
            kind = jax.devices()[0].device_kind.lower()
        except Exception:
            pass
        cap = (128 << 20) if ("v5" in kind or "v6" in kind) else (64 << 20)
    return int(0.85 * cap)


@functools.lru_cache(maxsize=1)
def _feature_align():
    """v6e/v7x MXUs are 2x256^2 -> align big feature dims to 256 there, 128 on v5e."""
    try:
        kind = jax.devices()[0].device_kind.lower()
    except Exception:
        kind = ""
    return 256 if ("v6" in kind or "v7" in kind or "tpu7" in kind) else 128


def _pad_feature(d):
    if _feature_align() == 256 and d >= 192:
        return _round_up(d, 256)
    return _round_up(d, LANE)


# --------------------------------------------------------------------------- #
# Kernel
# --------------------------------------------------------------------------- #
def _fused_mlp_kernel(*refs, n_linear, activation):
    """h = act(h @ W_l + b_l) for every layer, all on-chip.

    refs = (x_ref, w0_ref, b0_ref, w1_ref, b1_ref, ..., o_ref).
    x / W are bf16 (MXU fast path); accumulation, bias add and activation in f32.
    """
    x_ref = refs[0]
    o_ref = refs[-1]
    wb = refs[1:-1]

    h = x_ref[...]  # bf16 (tm, K0_pad)
    for l in range(n_linear):
        w_ref = wb[2 * l]
        b_ref = wb[2 * l + 1]
        y = jnp.dot(h, w_ref[...], preferred_element_type=jnp.float32)
        y = y + b_ref[...]  # (1, N_pad) broadcasts over rows, f32
        if l < n_linear - 1:
            if activation == "relu":
                y = jnp.maximum(y, 0.0)
            elif activation == "tanh":
                y = jnp.tanh(y)
            # Dropout == identity in eval mode; padded cols stay 0 (act(0)=0).
            h = y.astype(jnp.bfloat16)
        else:
            o_ref[...] = y.astype(o_ref.dtype)


# --------------------------------------------------------------------------- #
# Host-side wrapper
# --------------------------------------------------------------------------- #
def prepare_mlp_params(params):
    """One-time padding + bf16 cast of weights/biases (hoisted out of the hot path).

    params: list of (w, b), w: (K, N) f32, b: (N,) f32.
    Returns (weights, biases) with lane-dense padded shapes, bf16 / f32.
    """
    dims = [params[0][0].shape[0]] + [w.shape[1] for w, _ in params]
    dims_pad = [_pad_feature(d) for d in dims]
    weights, biases = [], []
    for l, (w, b) in enumerate(params):
        kp, np_ = dims_pad[l], dims_pad[l + 1]
        w_p = (jnp.zeros((kp, np_), jnp.bfloat16)
               .at[: w.shape[0], : w.shape[1]].set(w.astype(jnp.bfloat16)))
        b_p = (jnp.zeros((1, np_), jnp.float32)
               .at[0, : b.shape[0]].set(b.astype(jnp.float32)))
        weights.append(w_p)
        biases.append(b_p)
    return tuple(weights), tuple(biases)


@functools.partial(
    jax.jit, static_argnames=("activation", "out_dim", "single_buffer_weights")
)
def _fused_mlp_impl(x, weights, biases, activation, out_dim, single_buffer_weights):
    M, K0 = x.shape
    n_linear = len(weights)
    dims_pad = [weights[0].shape[0]] + [w.shape[1] for w in weights]

    # ---- VMEM footprint (weights single-buffered when supported) ----
    w_bytes = sum(int(w.size) * 2 for w in weights)
    b_bytes = sum(int(b.size) * 4 for b in biases)
    wmult = 1 if single_buffer_weights else 2
    max_dim = max(dims_pad)
    per_row = (2 * dims_pad[0] * 2        # x block, bf16, double-buffered
               + 2 * dims_pad[-1] * 4     # out block, f32, double-buffered
               + max_dim * (4 + 2))       # in-flight activation (f32 + bf16 copy)
    fixed = wmult * (w_bytes + b_bytes) + (2 << 20)   # weights + headroom
    budget = _vmem_budget_bytes()

    # ---- batch tile: biggest that fits VMEM; keep >=2 grid steps when M is
    # large (both TCs busy on v7x); never below 16 rows (bf16 sublane packing).
    tm = BF16_SUBLANE
    for cand in (1024, 512, 256, 128, 64, 32, 16):
        if fixed + cand * per_row > budget:
            continue
        if M >= 256 and _cdiv(M, cand) < 2:
            continue
        tm = cand
        break
    tm = min(tm, _round_up(M, BF16_SUBLANE))
    if fixed + tm * per_row > budget:
        # TODO(synk): tile K/N of oversized layers with an inner pltpu.emit_pipeline
        # instead of the all-weights-resident design (needed for huge MLPs on v7x).
        raise NotImplementedError("weight stack does not fit in VMEM")

    M_pad = _round_up(M, tm)
    grid = (M_pad // tm,)

    # ---- pad x (fuses with the pallas_call under jit) ----
    x_p = jnp.pad(x.astype(jnp.bfloat16),
                  ((0, M_pad - M), (0, dims_pad[0] - K0)))

    def _const_spec(shape):
        idx = lambda i: (0,) * len(shape)
        if single_buffer_weights:
            # grid-invariant block -> single buffer (halves weight VMEM)
            return pl.BlockSpec(shape, idx, pipeline_mode=pl.Buffered(1))
        return pl.BlockSpec(shape, idx)

    in_specs = [pl.BlockSpec((tm, dims_pad[0]), lambda i: (i, 0))]
    flat_inputs = [x_p]
    for l in range(n_linear):
        in_specs.append(_const_spec(weights[l].shape))
        in_specs.append(_const_spec(biases[l].shape))
        flat_inputs.append(weights[l])
        flat_inputs.append(biases[l])
    out_spec = pl.BlockSpec((tm, dims_pad[-1]), lambda i: (i, 0))

    # ---- scheduling hint for XLA ----
    flops = 2 * M_pad * sum(dims_pad[l] * dims_pad[l + 1] for l in range(n_linear))
    transcendentals = M_pad * sum(dims_pad[1:-1]) if activation == "tanh" else 0
    bytes_accessed = (M_pad * dims_pad[0] * 2 + w_bytes + b_bytes
                      + M_pad * dims_pad[-1] * 4)
    cost = pl.CostEstimate(flops=flops, transcendentals=transcendentals,
                           bytes_accessed=bytes_accessed)

    kernel = functools.partial(_fused_mlp_kernel, n_linear=n_linear,
                               activation=activation)
    out_p = pl.pallas_call(
        kernel,
        out_shape=jax.ShapeDtypeStruct((M_pad, dims_pad[-1]), jnp.float32),
        grid_spec=pltpu.PrefetchScalarGridSpec(
            num_scalar_prefetch=0,
            grid=grid,
            in_specs=in_specs,
            out_specs=out_spec,
        ),
        compiler_params=pltpu.CompilerParams(
            dimension_semantics=("parallel",),   # batch rows split across TCs
            vmem_limit_bytes=budget,             # ~85% of physical VMEM
        ),
        cost_estimate=cost,
    )(*flat_inputs)

    return out_p[:M, :out_dim]


_SINGLE_BUFFER_OK = None  # cached capability probe for pl.Buffered(1)


def fused_mlp_forward(x, weights, biases, activation, out_dim):
    """Forward pass of CustomModel via one fused Pallas kernel (eval mode)."""
    global _SINGLE_BUFFER_OK
    if _SINGLE_BUFFER_OK is None:
        try:
            out = _fused_mlp_impl(x, weights, biases, activation, out_dim, True)
            _SINGLE_BUFFER_OK = True
            return out
        except Exception:
            # This jax build rejects pipeline_mode / Buffered(1); use defaults.
            _SINGLE_BUFFER_OK = False
    return _fused_mlp_impl(x, weights, biases, activation, out_dim,
                           _SINGLE_BUFFER_OK)


# --------------------------------------------------------------------------- #
# Init (mimics nn.Linear default U[-1/sqrt(fan_in), 1/sqrt(fan_in)])
# --------------------------------------------------------------------------- #
def init_custom_model_params(key, input_size, hidden_sizes, output_size, num_layers):
    params = []
    in_features = input_size
    dims = [hidden_sizes[i] for i in range(num_layers)] + [output_size]
    for out_features in dims:
        key, kw, kb = jax.random.split(key, 3)
        bound = 1.0 / jnp.sqrt(jnp.float32(in_features))
        w = jax.random.uniform(kw, (in_features, out_features), jnp.float32,
                               -bound, bound)
        b = jax.random.uniform(kb, (out_features,), jnp.float32, -bound, bound)
        params.append((w, b))
        in_features = out_features
    return params


if __name__ == "__main__":
    # Small deterministic config consistent with the module's __init__.
    batch = 8
    input_size = 32
    hidden_sizes = [64, 64]
    output_size = 16
    num_layers = 2
    activation = "relu"
    dropout_rate = 0.1  # identity at inference

    key = jax.random.PRNGKey(0)
    key, kx = jax.random.split(key)
    x = jax.random.normal(kx, (batch, input_size), dtype=jnp.float32)

    params = init_custom_model_params(key, input_size, hidden_sizes,
                                      output_size, num_layers)
    weights, biases = prepare_mlp_params(params)   # hoisted: pad + bf16 cast once

    out = fused_mlp_forward(x, weights, biases, activation, output_size)
    out = jax.block_until_ready(out)

    # Pure-f32 reference; kernel uses bf16 operands with f32 accumulation, so
    # compare with a bf16-appropriate tolerance.
    ref = x
    for i, (w, b) in enumerate(params):
        ref = ref @ w + b
        if i != len(params) - 1:
            ref = jnp.maximum(ref, 0.0)

    assert out.shape == (batch, output_size)
    assert jnp.allclose(out, ref, atol=5e-2, rtol=5e-2), (
        float(jnp.max(jnp.abs(out - ref)))
    )

    print("KERNEL_OK")
</pallas_src>

<mosaic_0001>
module attributes {stable_mosaic.version = 11 : i64} {
  func.func @_fused_mlp_kernel(%arg0: i32, %arg1: memref<16x128xbf16, #tpu.memory_space<vmem>>, %arg2: memref<128x128xbf16, #tpu.memory_space<vmem>>, %arg3: memref<1x128xf32, #tpu.memory_space<vmem>>, %arg4: memref<128x128xbf16, #tpu.memory_space<vmem>>, %arg5: memref<1x128xf32, #tpu.memory_space<vmem>>, %arg6: memref<128x128xbf16, #tpu.memory_space<vmem>>, %arg7: memref<1x128xf32, #tpu.memory_space<vmem>>, %arg8: memref<16x128xf32, #tpu.memory_space<vmem>>) attributes {dimension_semantics = [#tpu.dimension_semantics<parallel>], iteration_bounds = array<i64: 1>, scalar_prefetch = 0 : i64, scratch_operands = 0 : i64, tpu.core_type = #tpu.core_type<tc>, window_params = [{transform_indices = @transform_0, window_bounds = array<i64: 16, 128>}, {pipeline_mode = #tpu.pipeline_mode<synchronous>, transform_indices = @transform_1, window_bounds = array<i64: 128, 128>}, {pipeline_mode = #tpu.pipeline_mode<synchronous>, transform_indices = @transform_2, window_bounds = array<i64: 1, 128>}, {pipeline_mode = #tpu.pipeline_mode<synchronous>, transform_indices = @transform_3, window_bounds = array<i64: 128, 128>}, {pipeline_mode = #tpu.pipeline_mode<synchronous>, transform_indices = @transform_4, window_bounds = array<i64: 1, 128>}, {pipeline_mode = #tpu.pipeline_mode<synchronous>, transform_indices = @transform_5, window_bounds = array<i64: 128, 128>}, {pipeline_mode = #tpu.pipeline_mode<synchronous>, transform_indices = @transform_6, window_bounds = array<i64: 1, 128>}, {transform_indices = @transform_7, window_bounds = array<i64: 16, 128>}]} {
    %c0 = arith.constant 0 : index
    %c0_0 = arith.constant 0 : index
    %0 = vector.load %arg1[%c0, %c0_0] : memref<16x128xbf16, #tpu.memory_space<vmem>>, vector<16x128xbf16>
    %c0_1 = arith.constant 0 : index
    %c0_2 = arith.constant 0 : index
    %1 = vector.load %arg2[%c0_1, %c0_2] : memref<128x128xbf16, #tpu.memory_space<vmem>>, vector<128x128xbf16>
    %cst = arith.constant dense<0.000000e+00> : vector<16x128xf32>
    %2 = tpu.matmul %0, %1, %cst {dimension_numbers = #tpu.dot_dimension_numbers<[1], [0], [0], [1], [0, 0, 1, 1], [], []>} : vector<16x128xbf16>, vector<128x128xbf16>, vector<16x128xf32> -> vector<16x128xf32>
    %c0_3 = arith.constant 0 : index
    %c0_4 = arith.constant 0 : index
    %3 = vector.load %arg3[%c0_3, %c0_4] : memref<1x128xf32, #tpu.memory_space<vmem>>, vector<1x128xf32>
    %4 = vector.broadcast %3 : vector<1x128xf32> to vector<16x128xf32>
    %5 = arith.addf %2, %4 : vector<16x128xf32>
    %cst_5 = arith.constant 0.000000e+00 : f32
    %6 = vector.broadcast %cst_5 : f32 to vector<16x128xf32>
    %7 = arith.maximumf %5, %6 : vector<16x128xf32>
    %8 = arith.truncf %7 : vector<16x128xf32> to vector<16x128xbf16>
    %c0_6 = arith.constant 0 : index
    %c0_7 = arith.constant 0 : index
    %9 = vector.load %arg4[%c0_6, %c0_7] : memref<128x128xbf16, #tpu.memory_space<vmem>>, vector<128x128xbf16>
    %cst_8 = arith.constant dense<0.000000e+00> : vector<16x128xf32>
    %10 = tpu.matmul %8, %9, %cst_8 {dimension_numbers = #tpu.dot_dimension_numbers<[1], [0], [0], [1], [0, 0, 1, 1], [], []>} : vector<16x128xbf16>, vector<128x128xbf16>, vector<16x128xf32> -> vector<16x128xf32>
    %c0_9 = arith.constant 0 : index
    %c0_10 = arith.constant 0 : index
    %11 = vector.load %arg5[%c0_9, %c0_10] : memref<1x128xf32, #tpu.memory_space<vmem>>, vector<1x128xf32>
    %12 = vector.broadcast %11 : vector<1x128xf32> to vector<16x128xf32>
    %13 = arith.addf %10, %12 : vector<16x128xf32>
    %cst_11 = arith.constant 0.000000e+00 : f32
    %14 = vector.broadcast %cst_11 : f32 to vector<16x128xf32>
    %15 = arith.maximumf %13, %14 : vector<16x128xf32>
    %16 = arith.truncf %15 : vector<16x128xf32> to vector<16x128xbf16>
    %c0_12 = arith.constant 0 : index
    %c0_13 = arith.constant 0 : index
    %17 = vector.load %arg6[%c0_12, %c0_13] : memref<128x128xbf16, #tpu.memory_space<vmem>>, vector<128x128xbf16>
    %cst_14 = arith.constant dense<0.000000e+00> : vector<16x128xf32>
    %18 = tpu.matmul %16, %17, %cst_14 {dimension_numbers = #tpu.dot_dimension_numbers<[1], [0], [0], [1], [0, 0, 1, 1], [], []>} : vector<16x128xbf16>, vector<128x128xbf16>, vector<16x128xf32> -> vector<16x128xf32>
    %c0_15 = arith.constant 0 : index
    %c0_16 = arith.constant 0 : index
    %19 = vector.load %arg7[%c0_15, %c0_16] : memref<1x128xf32, #tpu.memory_space<vmem>>, vector<1x128xf32>
    %20 = vector.broadcast %19 : vector<1x128xf32> to vector<16x128xf32>
    %21 = arith.addf %18, %20 : vector<16x128xf32>
    %c0_17 = arith.constant 0 : index
    %c0_18 = arith.constant 0 : index
    %22 = vector.load %arg8[%c0_17, %c0_18] : memref<16x128xf32, #tpu.memory_space<vmem>>, vector<16x128xf32>
    tpu.vector_store %arg8[%c0_17, %c0_18], %21 {strides = array<i32>} : memref<16x128xf32, #tpu.memory_space<vmem>>, vector<16x128xf32>,
    return
  }
  func.func @transform_0(%arg0: i32) -> (i32, i32) {
    %c0_i32 = arith.constant 0 : i32
    %c0_i32_0 = arith.constant 0 : i32
    return %arg0, %c0_i32 : i32, i32
  }
  func.func @transform_1(%arg0: i32) -> (i32, i32) {
    %c0_i32 = arith.constant 0 : i32
    %c0_i32_0 = arith.constant 0 : i32
    %c0_i32_1 = arith.constant 0 : i32
    return %c0_i32, %c0_i32_0 : i32, i32
  }
  func.func @transform_2(%arg0: i32) -> (i32, i32) {
    %c0_i32 = arith.constant 0 : i32
    %c0_i32_0 = arith.constant 0 : i32
    %c0_i32_1 = arith.constant 0 : i32
    return %c0_i32, %c0_i32_0 : i32, i32
  }
  func.func @transform_3(%arg0: i32) -> (i32, i32) {
    %c0_i32 = arith.constant 0 : i32
    %c0_i32_0 = arith.constant 0 : i32
    %c0_i32_1 = arith.constant 0 : i32
    return %c0_i32, %c0_i32_0 : i32, i32
  }
  func.func @transform_4(%arg0: i32) -> (i32, i32) {
    %c0_i32 = arith.constant 0 : i32
    %c0_i32_0 = arith.constant 0 : i32
    %c0_i32_1 = arith.constant 0 : i32
    return %c0_i32, %c0_i32_0 : i32, i32
  }
  func.func @transform_5(%arg0: i32) -> (i32, i32) {
    %c0_i32 = arith.constant 0 : i32
    %c0_i32_0 = arith.constant 0 : i32
    %c0_i32_1 = arith.constant 0 : i32
    return %c0_i32, %c0_i32_0 : i32, i32
  }
  func.func @transform_6(%arg0: i32) -> (i32, i32) {
    %c0_i32 = arith.constant 0 : i32
    %c0_i32_0 = arith.constant 0 : i32
    %c0_i32_1 = arith.constant 0 : i32
    return %c0_i32, %c0_i32_0 : i32, i32
  }
  func.func @transform_7(%arg0: i32) -> (i32, i32) {
    %c0_i32 = arith.constant 0 : i32
    %c0_i32_0 = arith.constant 0 : i32
    return %arg0, %c0_i32 : i32, i32
  }
}

module attributes {stable_mosaic.version = 11 : i64} {
  func.func @_fused_mlp_kernel(%arg0: i32, %arg1: memref<16x128xbf16, #tpu.memory_space<vmem>>, %arg2: memref<128x128xbf16, #tpu.memory_space<vmem>>, %arg3: memref<1x128xf32, #tpu.memory_space<vmem>>, %arg4: memref<128x128xbf16, #tpu.memory_space<vmem>>, %arg5: memref<1x128xf32, #tpu.memory_space<vmem>>, %arg6: memref<128x128xbf16, #tpu.memory_space<vmem>>, %arg7: memref<1x128xf32, #tpu.memory_space<vmem>>, %arg8: memref<16x128xf32, #tpu.memory_space<vmem>>) attributes {dimension_semantics = [#tpu.dimension_semantics<parallel>], iteration_bounds = array<i64: 1>, scalar_prefetch = 0 : i64, scratch_operands = 0 : i64, tpu.core_type = #tpu.core_type<tc>, window_params = [{transform_indices = @transform_0, window_bounds = array<i64: 16, 128>}, {pipeline_mode = #tpu.pipeline_mode<synchronous>, transform_indices = @transform_1, window_bounds = array<i64: 128, 128>}, {pipeline_mode = #tpu.pipeline_mode<synchronous>, transform_indices = @transform_2, window_bounds = array<i64: 1, 128>}, {pipeline_mode = #tpu.pipeline_mode<synchronous>, transform_indices = @transform_3, window_bounds = array<i64: 128, 128>}, {pipeline_mode = #tpu.pipeline_mode<synchronous>, transform_indices = @transform_4, window_bounds = array<i64: 1, 128>}, {pipeline_mode = #tpu.pipeline_mode<synchronous>, transform_indices = @transform_5, window_bounds = array<i64: 128, 128>}, {pipeline_mode = #tpu.pipeline_mode<synchronous>, transform_indices = @transform_6, window_bounds = array<i64: 1, 128>}, {transform_indices = @transform_7, window_bounds = array<i64: 16, 128>}]} {
    %c0 = arith.constant 0 : index
    %c0_0 = arith.constant 0 : index
    %0 = vector.load %arg1[%c0, %c0_0] : memref<16x128xbf16, #tpu.memory_space<vmem>>, vector<16x128xbf16>
    %c0_1 = arith.constant 0 : index
    %c0_2 = arith.constant 0 : index
    %1 = vector.load %arg2[%c0_1, %c0_2] : memref<128x128xbf16, #tpu.memory_space<vmem>>, vector<128x128xbf16>
    %cst = arith.constant dense<0.000000e+00> : vector<16x128xf32>
    %2 = tpu.matmul %0, %1, %cst {dimension_numbers = #tpu.dot_dimension_numbers<[1], [0], [0], [1], [0, 0, 1, 1], [], []>} : vector<16x128xbf16>, vector<128x128xbf16>, vector<16x128xf32> -> vector<16x128xf32>
    %c0_3 = arith.constant 0 : index
    %c0_4 = arith.constant 0 : index
    %3 = vector.load %arg3[%c0_3, %c0_4] : memref<1x128xf32, #tpu.memory_space<vmem>>, vector<1x128xf32>
    %4 = vector.broadcast %3 : vector<1x128xf32> to vector<16x128xf32>
    %5 = arith.addf %2, %4 : vector<16x128xf32>
    %cst_5 = arith.constant 0.000000e+00 : f32
    %6 = vector.broadcast %cst_5 : f32 to vector<16x128xf32>
    %7 = arith.maximumf %5, %6 : vector<16x128xf32>
    %8 = arith.truncf %7 : vector<16x128xf32> to vector<16x128xbf16>
    %c0_6 = arith.constant 0 : index
    %c0_7 = arith.constant 0 : index
    %9 = vector.load %arg4[%c0_6, %c0_7] : memref<128x128xbf16, #tpu.memory_space<vmem>>, vector<128x128xbf16>
    %cst_8 = arith.constant dense<0.000000e+00> : vector<16x128xf32>
    %10 = tpu.matmul %8, %9, %cst_8 {dimension_numbers = #tpu.dot_dimension_numbers<[1], [0], [0], [1], [0, 0, 1, 1], [], []>} : vector<16x128xbf16>, vector<128x128xbf16>, vector<16x128xf32> -> vector<16x128xf32>
    %c0_9 = arith.constant 0 : index
    %c0_10 = arith.constant 0 : index
    %11 = vector.load %arg5[%c0_9, %c0_10] : memref<1x128xf32, #tpu.memory_space<vmem>>, vector<1x128xf32>
    %12 = vector.broadcast %11 : vector<1x128xf32> to vector<16x128xf32>
    %13 = arith.addf %10, %12 : vector<16x128xf32>
    %cst_11 = arith.constant 0.000000e+00 : f32
    %14 = vector.broadcast %cst_11 : f32 to vector<16x128xf32>
    %15 = arith.maximumf %13, %14 : vector<16x128xf32>
    %16 = arith.truncf %15 : vector<16x128xf32> to vector<16x128xbf16>
    %c0_12 = arith.constant 0 : index
    %c0_13 = arith.constant 0 : index
    %17 = vector.load %arg6[%c0_12, %c0_13] : memref<128x128xbf16, #tpu.memory_space<vmem>>, vector<128x128xbf16>
    %cst_14 = arith.constant dense<0.000000e+00> : vector<16x128xf32>
    %18 = tpu.matmul %16, %17, %cst_14 {dimension_numbers = #tpu.dot_dimension_numbers<[1], [0], [0], [1], [0, 0, 1, 1], [], []>} : vector<16x128xbf16>, vector<128x128xbf16>, vector<16x128xf32> -> vector<16x128xf32>
    %c0_15 = arith.constant 0 : index
    %c0_16 = arith.constant 0 : index
    %19 = vector.load %arg7[%c0_15, %c0_16] : memref<1x128xf32, #tpu.memory_space<vmem>>, vector<1x128xf32>
    %20 = vector.broadcast %19 : vector<1x128xf32> to vector<16x128xf32>
    %21 = arith.addf %18, %20 : vector<16x128xf32>
    %c0_17 = arith.constant 0 : index
    %c0_18 = arith.constant 0 : index
    %22 = vector.load %arg8[%c0_17, %c0_18] : memref<16x128xf32, #tpu.memory_space<vmem>>, vector<16x128xf32>
    tpu.vector_store %arg8[%c0_17, %c0_18], %21 {strides = array<i32>} : memref<16x128xf32, #tpu.memory_space<vmem>>, vector<16x128xf32>,
    return
  }
  func.func @transform_0(%arg0: i32) -> (i32, i32) {
    %c0_i32 = arith.constant 0 : i32
    %c0_i32_0 = arith.constant 0 : i32
    return %arg0, %c0_i32 : i32, i32
  }
  func.func @transform_1(%arg0: i32) -> (i32, i32) {
    %c0_i32 = arith.constant 0 : i32
    %c0_i32_0 = arith.constant 0 : i32
    %c0_i32_1 = arith.constant 0 : i32
    return %c0_i32, %c0_i32_0 : i32, i32
  }
  func.func @transform_2(%arg0: i32) -> (i32, i32) {
    %c0_i32 = arith.constant 0 : i32
    %c0_i32_0 = arith.constant 0 : i32
    %c0_i32_1 = arith.constant 0 : i32
    return %c0_i32, %c0_i32_0 : i32, i32
  }
  func.func @transform_3(%arg0: i32) -> (i32, i32) {
    %c0_i32 = arith.constant 0 : i32
    %c0_i32_0 = arith.constant 0 : i32
    %c0_i32_1 = arith.constant 0 : i32
    return %c0_i32, %c0_i32_0 : i32, i32
  }
  func.func @transform_4(%arg0: i32) -> (i32, i32) {
    %c0_i32 = arith.constant 0 : i32
    %c0_i32_0 = arith.constant 0 : i32
    %c0_i32_1 = arith.constant 0 : i32
    return %c0_i32, %c0_i32_0 : i32, i32
  }
  func.func @transform_5(%arg0: i32) -> (i32, i32) {
    %c0_i32 = arith.constant 0 : i32
    %c0_i32_0 = arith.constant 0 : i32
    %c0_i32_1 = arith.constant 0 : i32
    return %c0_i32, %c0_i32_0 : i32, i32
  }
  func.func @transform_6(%arg0: i32) -> (i32, i32) {
    %c0_i32 = arith.constant 0 : i32
    %c0_i32_0 = arith.constant 0 : i32
    %c0_i32_1 = arith.constant 0 : i32
    return %c0_i32, %c0_i32_0 : i32, i32
  }
  func.func @transform_7(%arg0: i32) -> (i32, i32) {
    %c0_i32 = arith.constant 0 : i32
    %c0_i32_0 = arith.constant 0 : i32
    return %arg0, %c0_i32 : i32, i32
  }
}

</mosaic_0001>

<llo_original>
// kernel: _fused_mlp_impl.1
$region0: #{_fused_mlp_impl.1}
  #allocation0 [shape = 'u32[]', space=smem, size = 0x4, offset = 0x4, fixed_abs, tag = 'smem constant byte address 0x4 - core index']
  #allocation1 [shape = 'u32[144,128]{1,0:T(1,128)}', space=vmem, size = 0x12000, scoped, tag = 'internal scratch']
  %s0 = inlined_call_operand.vmem [shape: bf16[16,128], index: 0, kind: input, shape index: {}]
  %s1 = inlined_call_operand.hbm [shape: bf16[128,128], index: 1, kind: input, shape index: {}]
  %s2 = inlined_call_operand.vmem [shape: f32[1,128], index: 2, kind: input, shape index: {}]
  %s3 = inlined_call_operand.hbm [shape: bf16[128,128], index: 3, kind: input, shape index: {}]
  %s4 = inlined_call_operand.vmem [shape: f32[1,128], index: 4, kind: input, shape index: {}]
  %s5 = inlined_call_operand.hbm [shape: bf16[128,128], index: 5, kind: input, shape index: {}]
  %s6 = inlined_call_operand.vmem [shape: f32[1,128], index: 6, kind: input, shape index: {}]
  %s7 = inlined_call_operand.vmem [shape: f32[16,128], index: 7, kind: output, shape index: {}]
  %s8 = sld [smem:[#allocation0]]
  $region50: #{_fused_mlp_impl.1} parent=0
    _
  %s10 = ssub.s32 1, %s8
  %s11 = scalar_select 0, %s10, %s8
  $region1: #{_fused_mlp_impl.1} parent=0
    #allocation2 [shape = 'u8[32768]{0}', space=vmem, size = 0x8000, scoped, tag = 'input window, operand 1, single buffered']
    #allocation3 [shape = 's32[1]{0}', space=sflag, size = 0x4, scoped, tag = 'scoped memory for _fused_mlp_impl.1']
    #allocation4 [shape = 'u8[32768]{0}', space=vmem, size = 0x8000, scoped, tag = 'input window, operand 3, single buffered']
    #allocation5 [shape = 's32[1]{0}', space=sflag, size = 0x4, scoped, tag = 'scoped memory for _fused_mlp_impl.1']
    #allocation6 [shape = 'u8[32768]{0}', space=vmem, size = 0x8000, scoped, tag = 'input window, operand 5, single buffered']
    %12 = vsyncpa [#allocation3], 0
    %13 = vsyncpa [#allocation5], 0
    // Predicated region
    $region2: #{_fused_mlp_impl.1} parent=1 // pred_check
      _
    $region3: #{_fused_mlp_impl.1} parent=1 // pred_check_branch
      %15 = sbr.rel (0) target = $region5
    $region4: #{_fused_mlp_impl.1} parent=1 // pred_region
      _
    $region5: #{_fused_mlp_impl.1} parent=1 // pred_fallthru
      _
    // Predicated region
    $region6: #{_fused_mlp_impl.1} parent=1 // pred_check
      _
    $region7: #{_fused_mlp_impl.1} parent=1 // pred_check_branch
      %17 = sbr.rel (0) target = $region9
    $region8: #{_fused_mlp_impl.1} parent=1 // pred_region
      %s19 = ssub.s32 1024, 1024
      %20 = vsyncadd [#allocation3], %s19
      %s21 = sshll.u32 [#allocation2], 4
      %s22 = int_to_ptr.vmem [resolvable:$true] %s21
      %27 = dma.hbm_to_vmem [thread:$0]  %s1, 1024, %s22, [#allocation3], 64, 64, 4
    $region9: #{_fused_mlp_impl.1} parent=1 // pred_fallthru
      _
    // Predicated region
    $region10: #{_fused_mlp_impl.1} parent=1 // pred_check
      _
    $region11: #{_fused_mlp_impl.1} parent=1 // pred_check_branch
      %29 = sbr.rel (0) target = $region13
    $region12: #{_fused_mlp_impl.1} parent=1 // pred_region
      _
    $region13: #{_fused_mlp_impl.1} parent=1 // pred_fallthru
      _
    // Predicated region
    $region14: #{_fused_mlp_impl.1} parent=1 // pred_check
      _
    $region15: #{_fused_mlp_impl.1} parent=1 // pred_check_branch
      %31 = sbr.rel (0) target = $region17
    $region16: #{_fused_mlp_impl.1} parent=1 // pred_region
      %s33 = ssub.s32 1024, 1024
      %34 = vsyncadd [#allocation5], %s33
      %s35 = sshll.u32 [#allocation4], 4
      %s36 = int_to_ptr.vmem [resolvable:$true] %s35
      %41 = dma.hbm_to_vmem [thread:$0]  %s3, 1024, %s36, [#allocation5], 64, 64, 4
    $region17: #{_fused_mlp_impl.1} parent=1 // pred_fallthru
      _
    // Predicated region
    $region18: #{_fused_mlp_impl.1} parent=1 // pred_check
      _
    $region19: #{_fused_mlp_impl.1} parent=1 // pred_check_branch
      %43 = sbr.rel (0) target = $region21
    $region20: #{_fused_mlp_impl.1} parent=1 // pred_region
      _
    $region21: #{_fused_mlp_impl.1} parent=1 // pred_fallthru
      _
    // Predicated region
    $region22: #{_fused_mlp_impl.1} parent=1 // pred_check
      _
    $region23: #{_fused_mlp_impl.1} parent=1 // pred_check_branch
      %45 = sbr.rel (0) target = $region25
    $region24: #{_fused_mlp_impl.1} parent=1 // pred_region
      %s47 = ssub.s32 1024, 1024
      %48 = vsyncadd [#allocation5], %s47
      %s49 = sshll.u32 [#allocation6], 4
      %s50 = int_to_ptr.vmem [resolvable:$true] %s49
      %55 = dma.hbm_to_vmem [thread:$0]  %s5, 1024, %s50, [#allocation5], 64, 64, 4
    $region25: #{_fused_mlp_impl.1} parent=1 // pred_fallthru
      _
    // Predicated region
    $region26: #{_fused_mlp_impl.1} parent=1 // pred_check
      _
    $region27: #{_fused_mlp_impl.1} parent=1 // pred_check_branch
      %57 = sbr.rel (0) target = $region29
    $region28: #{_fused_mlp_impl.1} parent=1 // pred_region
      _
    $region29: #{_fused_mlp_impl.1} parent=1 // pred_fallthru
      _
    // Predicated region
    $region30: #{_fused_mlp_impl.1} parent=1 // pred_check
      _
    $region31: #{_fused_mlp_impl.1} parent=1 // pred_check_branch
      %59 = sbr.rel (0) target = $region33
    $region32: #{_fused_mlp_impl.1} parent=1 // pred_region
      %60 = dma.done [#allocation3], 1024
    $region33: #{_fused_mlp_impl.1} parent=1 // pred_fallthru
      _
    // Predicated region
    $region34: #{_fused_mlp_impl.1} parent=1 // pred_check
      _
    $region35: #{_fused_mlp_impl.1} parent=1 // pred_check_branch
      %62 = sbr.rel (0) target = $region37
    $region36: #{_fused_mlp_impl.1} parent=1 // pred_region
      %63 = dma.done [#allocation5], 1024
    $region37: #{_fused_mlp_impl.1} parent=1 // pred_fallthru
      _
    // Predicated region
    $region38: #{_fused_mlp_impl.1} parent=1 // pred_check
      _
    $region39: #{_fused_mlp_impl.1} parent=1 // pred_check_branch
      %65 = sbr.rel (0) target = $region41
    $region40: #{_fused_mlp_impl.1} parent=1 // pred_region
      %66 = dma.done [#allocation5], 1024
    $region41: #{_fused_mlp_impl.1} parent=1 // pred_fallthru
      _
    %v68 = vld [vmem:[%s0] sm:$0xf]
    %v69 = vld [vmem:[%s0 + $0x4] sm:$0xf]
    %v70 = vld [vmem:[#allocation2] sm:$0xf]
    %v71 = vld [vmem:[#allocation2 + $0x4] sm:$0xf]
    %v72 = vld [vmem:[#allocation2 + $0x8] sm:$0xf]
    %v73 = vld [vmem:[#allocation2 + $0xc] sm:$0xf]
    %v74 = vld [vmem:[#allocation2 + $0x10] sm:$0xf]
    %v75 = vld [vmem:[#allocation2 + $0x14] sm:$0xf]
    %v76 = vld [vmem:[#allocation2 + $0x18] sm:$0xf]
    %v77 = vld [vmem:[#allocation2 + $0x1c] sm:$0xf]
    %v78 = vld [vmem:[#allocation2 + $0x20] sm:$0xf]
    %v79 = vld [vmem:[#allocation2 + $0x24] sm:$0xf]
    %v80 = vld [vmem:[#allocation2 + $0x28] sm:$0xf]
    %v81 = vld [vmem:[#allocation2 + $0x2c] sm:$0xf]
    %v82 = vld [vmem:[#allocation2 + $0x30] sm:$0xf]
    %v83 = vld [vmem:[#allocation2 + $0x34] sm:$0xf]
    %v84 = vld [vmem:[#allocation2 + $0x38] sm:$0xf]
    %v85 = vld [vmem:[#allocation2 + $0x3c] sm:$0xf]
    %v86 = vld [vmem:[%s2] sm:$0x1]
    %v88 = vlaneseq
    %v89 = vshrl.u32 %v88, 7
    %v90 = vsub.s32 0, %v89
    %v91 = vrot.slane %v86, %v90
    %v95 = vunpack.c.l.b16 %v68
    %v96 = vunpack.c.l.b16 %v69
    %v97 = vpack.c.b16 %v96, %v95
    %v115 = vunpack.c.l.b16 %v70
    %v116 = vunpack.c.l.b16 %v71
    %v117 = vunpack.c.l.b16 %v72
    %v118 = vunpack.c.l.b16 %v73
    %v119 = vunpack.c.l.b16 %v74
    %v120 = vunpack.c.l.b16 %v75
    %v121 = vunpack.c.l.b16 %v76
    %v122 = vunpack.c.l.b16 %v77
    %v123 = vunpack.c.l.b16 %v78
    %v124 = vunpack.c.l.b16 %v79
    %v125 = vunpack.c.l.b16 %v80
    %v126 = vunpack.c.l.b16 %v81
    %v127 = vunpack.c.l.b16 %v82
    %v128 = vunpack.c.l.b16 %v83
    %v129 = vunpack.c.l.b16 %v84
    %v130 = vunpack.c.l.b16 %v85
    %v131 = vpack.c.b16 %v116, %v115
    %v132 = vpack.c.b16 %v118, %v117
    %v133 = vpack.c.b16 %v120, %v119
    %v134 = vpack.c.b16 %v122, %v121
    %v135 = vpack.c.b16 %v124, %v123
    %v136 = vpack.c.b16 %v126, %v125
    %v137 = vpack.c.b16 %v128, %v127
    %v138 = vpack.c.b16 %v130, %v129
    %147 = vmatprep.subr.bf16.mxu0 0
    %148 = vmatpush1.bf16.msra.mxu0 %v131
    %149 = vmatprep.subr.bf16.mxu0 0
    %150 = vmatpush1.bf16.msra.mxu0 %v132
    %151 = vmatprep.subr.bf16.mxu0 0
    %152 = vmatpush1.bf16.msra.mxu0 %v133
    %153 = vmatprep.subr.bf16.mxu0 0
    %154 = vmatpush1.bf16.msra.mxu0 %v134
    %155 = vmatprep.subr.bf16.mxu0 0
    %156 = vmatpush1.bf16.msra.mxu0 %v135
    %157 = vmatprep.subr.bf16.mxu0 0
    %158 = vmatpush1.bf16.msra.mxu0 %v136
    %159 = vmatprep.subr.bf16.mxu0 0
    %160 = vmatpush1.bf16.msra.mxu0 %v137
    %161 = vmatprep.subr.bf16.mxu0 0
    %162 = vmatpush1.bf16.msra.mxu0 %v138
    %163 = vmatprep.subr.bf16.mxu0 0
    %164 = vmatpush1.bf16.msra.mxu0 0
    %165 = vmatprep.subr.bf16.mxu0 0
    %166 = vmatpush1.bf16.msra.mxu0 0
    %167 = vmatprep.subr.bf16.mxu0 0
    %168 = vmatpush1.bf16.msra.mxu0 0
    %169 = vmatprep.subr.bf16.mxu0 0
    %170 = vmatpush1.bf16.msra.mxu0 0
    %171 = vmatprep.subr.bf16.mxu0 0
    %172 = vmatpush1.bf16.msra.mxu0 0
    %173 = vmatprep.subr.bf16.mxu0 0
    %174 = vmatpush1.bf16.msra.mxu0 0
    %175 = vmatprep.subr.bf16.mxu0 0
    %176 = vmatpush1.bf16.msra.mxu0 0
    %177 = vmatprep.subr.bf16.mxu0 0
    %178 = vmatpush1.bf16.msra.mxu0 0
    %179 = vmatprep.mubr.bf16.mxu0 0
    %180 = vmatmul.mubr.bf16.gmra.mrb[0].mxu0 %v97
    %v181 = vpop.f32.mrb[0].mxu0
    %v182 = vadd.f32 %v91, %v181
    %v183 = vpop.f32.mrb[0].mxu0
    %v184 = vpop.f32.mrb[0].mxu0
    %v185 = vadd.f32 %v91, %v184
    %v186 = vpop.f32.mrb[0].mxu0
    %187 = vdwg.mxu0
    %v188 = vmax.f32 %v182, 0.0
    %v189 = vmax.f32 %v185, 0.0
    %v190 = vpack.c.bf16 %v189, %v188
    %v191 = vld [vmem:[#allocation4] sm:$0xf]
    %v192 = vld [vmem:[#allocation4 + $0x4] sm:$0xf]
    %v193 = vld [vmem:[#allocation4 + $0x8] sm:$0xf]
    %v194 = vld [vmem:[#allocation4 + $0xc] sm:$0xf]
    %v195 = vld [vmem:[#allocation4 + $0x10] sm:$0xf]
    %v196 = vld [vmem:[#allocation4 + $0x14] sm:$0xf]
    %v197 = vld [vmem:[#allocation4 + $0x18] sm:$0xf]
    %v198 = vld [vmem:[#allocation4 + $0x1c] sm:$0xf]
    %v199 = vld [vmem:[#allocation4 + $0x20] sm:$0xf]
    %v200 = vld [vmem:[#allocation4 + $0x24] sm:$0xf]
    %v201 = vld [vmem:[#allocation4 + $0x28] sm:$0xf]
    %v202 = vld [vmem:[#allocation4 + $0x2c] sm:$0xf]
    %v203 = vld [vmem:[#allocation4 + $0x30] sm:$0xf]
    %v204 = vld [vmem:[#allocation4 + $0x34] sm:$0xf]
    %v205 = vld [vmem:[#allocation4 + $0x38] sm:$0xf]
    %v206 = vld [vmem:[#allocation4 + $0x3c] sm:$0xf]
    %v207 = vld [vmem:[%s4] sm:$0x1]
    %v209 = vlaneseq
    %v210 = vshrl.u32 %v209, 7
    %v211 = vsub.s32 0, %v210
    %v212 = vrot.slane %v207, %v211
    %v230 = vunpack.c.l.b16 %v191
    %v231 = vunpack.c.l.b16 %v192
    %v232 = vunpack.c.l.b16 %v193
    %v233 = vunpack.c.l.b16 %v194
    %v234 = vunpack.c.l.b16 %v195
    %v235 = vunpack.c.l.b16 %v196
    %v236 = vunpack.c.l.b16 %v197
    %v237 = vunpack.c.l.b16 %v198
    %v238 = vunpack.c.l.b16 %v199
    %v239 = vunpack.c.l.b16 %v200
    %v240 = vunpack.c.l.b16 %v201
    %v241 = vunpack.c.l.b16 %v202
    %v242 = vunpack.c.l.b16 %v203
    %v243 = vunpack.c.l.b16 %v204
    %v244 = vunpack.c.l.b16 %v205
    %v245 = vunpack.c.l.b16 %v206
    %v246 = vpack.c.b16 %v231, %v230
    %v247 = vpack.c.b16 %v233, %v232
    %v248 = vpack.c.b16 %v235, %v234
    %v249 = vpack.c.b16 %v237, %v236
    %v250 = vpack.c.b16 %v239, %v238
    %v251 = vpack.c.b16 %v241, %v240
    %v252 = vpack.c.b16 %v243, %v242
    %v253 = vpack.c.b16 %v245, %v244
    %262 = vmatprep.subr.bf16.mxu0 0
    %263 = vmatpush1.bf16.msra.mxu0 %v246
    %264 = vmatprep.subr.bf16.mxu0 0
    %265 = vmatpush1.bf16.msra.mxu0 %v247
    %266 = vmatprep.subr.bf16.mxu0 0
    %267 = vmatpush1.bf16.msra.mxu0 %v248
    %268 = vmatprep.subr.bf16.mxu0 0
    %269 = vmatpush1.bf16.msra.mxu0 %v249
    %270 = vmatprep.subr.bf16.mxu0 0
    %271 = vmatpush1.bf16.msra.mxu0 %v250
    %272 = vmatprep.subr.bf16.mxu0 0
    %273 = vmatpush1.bf16.msra.mxu0 %v251
    %274 = vmatprep.subr.bf16.mxu0 0
    %275 = vmatpush1.bf16.msra.mxu0 %v252
    %276 = vmatprep.subr.bf16.mxu0 0
    %277 = vmatpush1.bf16.msra.mxu0 %v253
    %278 = vmatprep.subr.bf16.mxu0 0
    %279 = vmatpush1.bf16.msra.mxu0 0
    %280 = vmatprep.subr.bf16.mxu0 0
    %281 = vmatpush1.bf16.msra.mxu0 0
    %282 = vmatprep.subr.bf16.mxu0 0
    %283 = vmatpush1.bf16.msra.mxu0 0
    %284 = vmatprep.subr.bf16.mxu0 0
    %285 = vmatpush1.bf16.msra.mxu0 0
    %286 = vmatprep.subr.bf16.mxu0 0
    %287 = vmatpush1.bf16.msra.mxu0 0
    %288 = vmatprep.subr.bf16.mxu0 0
    %289 = vmatpush1.bf16.msra.mxu0 0
    %290 = vmatprep.subr.bf16.mxu0 0
    %291 = vmatpush1.bf16.msra.mxu0 0
    %292 = vmatprep.subr.bf16.mxu0 0
    %293 = vmatpush1.bf16.msra.mxu0 0
    %294 = vmatprep.mubr.bf16.mxu0 0
    %295 = vmatmul.mubr.bf16.gmra.mrb[0].mxu0 %v190
    %v296 = vpop.f32.mrb[0].mxu0
    %v297 = vadd.f32 %v212, %v296
    %v298 = vpop.f32.mrb[0].mxu0
    %v299 = vpop.f32.mrb[0].mxu0
    %v300 = vadd.f32 %v212, %v299
    %v301 = vpop.f32.mrb[0].mxu0
    %302 = vdwg.mxu0
    %v303 = vmax.f32 %v297, 0.0
    %v304 = vmax.f32 %v300, 0.0
    %v305 = vpack.c.bf16 %v304, %v303
    %v306 = vld [vmem:[#allocation6] sm:$0xf]
    %v307 = vld [vmem:[#allocation6 + $0x4] sm:$0xf]
    %v308 = vld [vmem:[#allocation6 + $0x8] sm:$0xf]
    %v309 = vld [vmem:[#allocation6 + $0xc] sm:$0xf]
    %v310 = vld [vmem:[#allocation6 + $0x10] sm:$0xf]
    %v311 = vld [vmem:[#allocation6 + $0x14] sm:$0xf]
    %v312 = vld [vmem:[#allocation6 + $0x18] sm:$0xf]
    %v313 = vld [vmem:[#allocation6 + $0x1c] sm:$0xf]
    %v314 = vld [vmem:[#allocation6 + $0x20] sm:$0xf]
    %v315 = vld [vmem:[#allocation6 + $0x24] sm:$0xf]
    %v316 = vld [vmem:[#allocation6 + $0x28] sm:$0xf]
    %v317 = vld [vmem:[#allocation6 + $0x2c] sm:$0xf]
    %v318 = vld [vmem:[#allocation6 + $0x30] sm:$0xf]
    %v319 = vld [vmem:[#allocation6 + $0x34] sm:$0xf]
    %v320 = vld [vmem:[#allocation6 + $0x38] sm:$0xf]
    %v321 = vld [vmem:[#allocation6 + $0x3c] sm:$0xf]
    %v322 = vld [vmem:[%s6] sm:$0x1]
    %v324 = vlaneseq
    %v325 = vshrl.u32 %v324, 7
    %v326 = vsub.s32 0, %v325
    %v327 = vrot.slane %v322, %v326
    %v345 = vunpack.c.l.b16 %v306
    %v346 = vunpack.c.l.b16 %v307
    %v347 = vunpack.c.l.b16 %v308
    %v348 = vunpack.c.l.b16 %v309
    %v349 = vunpack.c.l.b16 %v310
    %v350 = vunpack.c.l.b16 %v311
    %v351 = vunpack.c.l.b16 %v312
    %v352 = vunpack.c.l.b16 %v313
    %v353 = vunpack.c.l.b16 %v314
    %v354 = vunpack.c.l.b16 %v315
    %v355 = vunpack.c.l.b16 %v316
    %v356 = vunpack.c.l.b16 %v317
    %v357 = vunpack.c.l.b16 %v318
    %v358 = vunpack.c.l.b16 %v319
    %v359 = vunpack.c.l.b16 %v320
    %v360 = vunpack.c.l.b16 %v321
    %v361 = vpack.c.b16 %v346, %v345
    %v362 = vpack.c.b16 %v348, %v347
    %v363 = vpack.c.b16 %v350, %v349
    %v364 = vpack.c.b16 %v352, %v351
    %v365 = vpack.c.b16 %v354, %v353
    %v366 = vpack.c.b16 %v356, %v355
    %v367 = vpack.c.b16 %v358, %v357
    %v368 = vpack.c.b16 %v360, %v359
    %377 = vmatprep.subr.bf16.mxu0 0
    %378 = vmatpush1.bf16.msra.mxu0 %v361
    %379 = vmatprep.subr.bf16.mxu0 0
    %380 = vmatpush1.bf16.msra.mxu0 %v362
    %381 = vmatprep.subr.bf16.mxu0 0
    %382 = vmatpush1.bf16.msra.mxu0 %v363
    %383 = vmatprep.subr.bf16.mxu0 0
    %384 = vmatpush1.bf16.msra.mxu0 %v364
    %385 = vmatprep.subr.bf16.mxu0 0
    %386 = vmatpush1.bf16.msra.mxu0 %v365
    %387 = vmatprep.subr.bf16.mxu0 0
    %388 = vmatpush1.bf16.msra.mxu0 %v366
    %389 = vmatprep.subr.bf16.mxu0 0
    %390 = vmatpush1.bf16.msra.mxu0 %v367
    %391 = vmatprep.subr.bf16.mxu0 0
    %392 = vmatpush1.bf16.msra.mxu0 %v368
    %393 = vmatprep.subr.bf16.mxu0 0
    %394 = vmatpush1.bf16.msra.mxu0 0
    %395 = vmatprep.subr.bf16.mxu0 0
    %396 = vmatpush1.bf16.msra.mxu0 0
    %397 = vmatprep.subr.bf16.mxu0 0
    %398 = vmatpush1.bf16.msra.mxu0 0
    %399 = vmatprep.subr.bf16.mxu0 0
    %400 = vmatpush1.bf16.msra.mxu0 0
    %401 = vmatprep.subr.bf16.mxu0 0
    %402 = vmatpush1.bf16.msra.mxu0 0
    %403 = vmatprep.subr.bf16.mxu0 0
    %404 = vmatpush1.bf16.msra.mxu0 0
    %405 = vmatprep.subr.bf16.mxu0 0
    %406 = vmatpush1.bf16.msra.mxu0 0
    %407 = vmatprep.subr.bf16.mxu0 0
    %408 = vmatpush1.bf16.msra.mxu0 0
    %409 = vmatprep.mubr.bf16.mxu0 0
    %410 = vmatmul.mubr.bf16.gmra.mrb[0].mxu0 %v305
    %v411 = vpop.f32.mrb[0].mxu0
    %v412 = vadd.f32 %v327, %v411
    %v413 = vpop.f32.mrb[0].mxu0
    %v414 = vpop.f32.mrb[0].mxu0
    %v415 = vadd.f32 %v327, %v414
    %v416 = vpop.f32.mrb[0].mxu0
    %417 = vdwg.mxu0
    %418 = vst [vmem:[%s7] sm:$0xff] %v412
    %419 = vst [vmem:[%s7 + $0x8] sm:$0xff] %v415
    // Predicated region
    $region42: #{_fused_mlp_impl.1} parent=1 // pred_check
      _
    $region43: #{_fused_mlp_impl.1} parent=1 // pred_check_branch
      %421 = sbr.rel (0) target = $region45
    $region44: #{_fused_mlp_impl.1} parent=1 // pred_region
      _
    $region45: #{_fused_mlp_impl.1} parent=1 // pred_fallthru
      _
    // Predicated region
    $region46: #{_fused_mlp_impl.1} parent=1 // pred_check
      _
    $region47: #{_fused_mlp_impl.1} parent=1 // pred_check_branch
      %423 = sbr.rel (0) target = $region49
    $region48: #{_fused_mlp_impl.1} parent=1 // pred_region
      _
    $region49: #{_fused_mlp_impl.1} parent=1 // pred_fallthru
      _
    %424 = vsyncpa [#allocation3], 1
    %425 = vsyncpa [#allocation5], 1

// kernel: _fused_mlp_impl.1
$region0: #{_fused_mlp_impl.1}
  #allocation0 [shape = 'u32[]', space=smem, size = 0x4, offset = 0x4, fixed_abs, tag = 'smem constant byte address 0x4 - core index']
  #allocation1 [shape = 'u32[144,128]{1,0:T(1,128)}', space=vmem, size = 0x12000, scoped, tag = 'internal scratch']
  %s0 = inlined_call_operand.vmem [shape: bf16[16,128], index: 0, kind: input, shape index: {}]
  %s1 = inlined_call_operand.hbm [shape: bf16[128,128], index: 1, kind: input, shape index: {}]
  %s2 = inlined_call_operand.vmem [shape: f32[1,128], index: 2, kind: input, shape index: {}]
  %s3 = inlined_call_operand.hbm [shape: bf16[128,128], index: 3, kind: input, shape index: {}]
  %s4 = inlined_call_operand.vmem [shape: f32[1,128], index: 4, kind: input, shape index: {}]
  %s5 = inlined_call_operand.hbm [shape: bf16[128,128], index: 5, kind: input, shape index: {}]
  %s6 = inlined_call_operand.vmem [shape: f32[1,128], index: 6, kind: input, shape index: {}]
  %s7 = inlined_call_operand.vmem [shape: f32[16,128], index: 7, kind: output, shape index: {}]
  %s8 = sld [smem:[#allocation0]]
  $region50: #{_fused_mlp_impl.1} parent=0
    _
  %s10 = ssub.s32 1, %s8
  %s11 = scalar_select 0, %s10, %s8
  $region1: #{_fused_mlp_impl.1} parent=0
    #allocation2 [shape = 'u8[32768]{0}', space=vmem, size = 0x8000, scoped, tag = 'input window, operand 1, single buffered']
    #allocation3 [shape = 's32[1]{0}', space=sflag, size = 0x4, scoped, tag = 'scoped memory for _fused_mlp_impl.1']
    #allocation4 [shape = 'u8[32768]{0}', space=vmem, size = 0x8000, scoped, tag = 'input window, operand 3, single buffered']
    #allocation5 [shape = 's32[1]{0}', space=sflag, size = 0x4, scoped, tag = 'scoped memory for _fused_mlp_impl.1']
    #allocation6 [shape = 'u8[32768]{0}', space=vmem, size = 0x8000, scoped, tag = 'input window, operand 5, single buffered']
    %12 = vsyncpa [#allocation3], 0
    %13 = vsyncpa [#allocation5], 0
    // Predicated region
    $region2: #{_fused_mlp_impl.1} parent=1 // pred_check
      _
    $region3: #{_fused_mlp_impl.1} parent=1 // pred_check_branch
      %15 = sbr.rel (0) target = $region5
    $region4: #{_fused_mlp_impl.1} parent=1 // pred_region
      _
    $region5: #{_fused_mlp_impl.1} parent=1 // pred_fallthru
      _
    // Predicated region
    $region6: #{_fused_mlp_impl.1} parent=1 // pred_check
      _
    $region7: #{_fused_mlp_impl.1} parent=1 // pred_check_branch
      %17 = sbr.rel (0) target = $region9
    $region8: #{_fused_mlp_impl.1} parent=1 // pred_region
      %s19 = ssub.s32 1024, 1024
      %20 = vsyncadd [#allocation3], %s19
      %s21 = sshll.u32 [#allocation2], 4
      %s22 = int_to_ptr.vmem [resolvable:$true] %s21
      %27 = dma.hbm_to_vmem [thread:$0]  %s1, 1024, %s22, [#allocation3], 64, 64, 4
    $region9: #{_fused_mlp_impl.1} parent=1 // pred_fallthru
      _
    // Predicated region
    $region10: #{_fused_mlp_impl.1} parent=1 // pred_check
      _
    $region11: #{_fused_mlp_impl.1} parent=1 // pred_check_branch
      %29 = sbr.rel (0) target = $region13
    $region12: #{_fused_mlp_impl.1} parent=1 // pred_region
      _
    $region13: #{_fused_mlp_impl.1} parent=1 // pred_fallthru
      _
    // Predicated region
    $region14: #{_fused_mlp_impl.1} parent=1 // pred_check
      _
    $region15: #{_fused_mlp_impl.1} parent=1 // pred_check_branch
      %31 = sbr.rel (0) target = $region17
    $region16: #{_fused_mlp_impl.1} parent=1 // pred_region
      %s33 = ssub.s32 1024, 1024
      %34 = vsyncadd [#allocation5], %s33
      %s35 = sshll.u32 [#allocation4], 4
      %s36 = int_to_ptr.vmem [resolvable:$true] %s35
      %41 = dma.hbm_to_vmem [thread:$0]  %s3, 1024, %s36, [#allocation5], 64, 64, 4
    $region17: #{_fused_mlp_impl.1} parent=1 // pred_fallthru
      _
    // Predicated region
    $region18: #{_fused_mlp_impl.1} parent=1 // pred_check
      _
    $region19: #{_fused_mlp_impl.1} parent=1 // pred_check_branch
      %43 = sbr.rel (0) target = $region21
    $region20: #{_fused_mlp_impl.1} parent=1 // pred_region
      _
    $region21: #{_fused_mlp_impl.1} parent=1 // pred_fallthru
      _
    // Predicated region
    $region22: #{_fused_mlp_impl.1} parent=1 // pred_check
      _
    $region23: #{_fused_mlp_impl.1} parent=1 // pred_check_branch
      %45 = sbr.rel (0) target = $region25
    $region24: #{_fused_mlp_impl.1} parent=1 // pred_region
      %s47 = ssub.s32 1024, 1024
      %48 = vsyncadd [#allocation5], %s47
      %s49 = sshll.u32 [#allocation6], 4
      %s50 = int_to_ptr.vmem [resolvable:$true] %s49
      %55 = dma.hbm_to_vmem [thread:$0]  %s5, 1024, %s50, [#allocation5], 64, 64, 4
    $region25: #{_fused_mlp_impl.1} parent=1 // pred_fallthru
      _
    // Predicated region
    $region26: #{_fused_mlp_impl.1} parent=1 // pred_check
      _
    $region27: #{_fused_mlp_impl.1} parent=1 // pred_check_branch
      %57 = sbr.rel (0) target = $region29
    $region28: #{_fused_mlp_impl.1} parent=1 // pred_region
      _
    $region29: #{_fused_mlp_impl.1} parent=1 // pred_fallthru
      _
    // Predicated region
    $region30: #{_fused_mlp_impl.1} parent=1 // pred_check
      _
    $region31: #{_fused_mlp_impl.1} parent=1 // pred_check_branch
      %59 = sbr.rel (0) target = $region33
    $region32: #{_fused_mlp_impl.1} parent=1 // pred_region
      %60 = dma.done [#allocation3], 1024
    $region33: #{_fused_mlp_impl.1} parent=1 // pred_fallthru
      _
    // Predicated region
    $region34: #{_fused_mlp_impl.1} parent=1 // pred_check
      _
    $region35: #{_fused_mlp_impl.1} parent=1 // pred_check_branch
      %62 = sbr.rel (0) target = $region37
    $region36: #{_fused_mlp_impl.1} parent=1 // pred_region
      %63 = dma.done [#allocation5], 1024
    $region37: #{_fused_mlp_impl.1} parent=1 // pred_fallthru
      _
    // Predicated region
    $region38: #{_fused_mlp_impl.1} parent=1 // pred_check
      _
    $region39: #{_fused_mlp_impl.1} parent=1 // pred_check_branch
      %65 = sbr.rel (0) target = $region41
    $region40: #{_fused_mlp_impl.1} parent=1 // pred_region
      %66 = dma.done [#allocation5], 1024
    $region41: #{_fused_mlp_impl.1} parent=1 // pred_fallthru
      _
    %v68 = vld [vmem:[%s0] sm:$0xf]
    %v69 = vld [vmem:[%s0 + $0x4] sm:$0xf]
    %v70 = vld [vmem:[#allocation2] sm:$0xf]
    %v71 = vld [vmem:[#allocation2 + $0x4] sm:$0xf]
    %v72 = vld [vmem:[#allocation2 + $0x8] sm:$0xf]
    %v73 = vld [vmem:[#allocation2 + $0xc] sm:$0xf]
    %v74 = vld [vmem:[#allocation2 + $0x10] sm:$0xf]
    %v75 = vld [vmem:[#allocation2 + $0x14] sm:$0xf]
    %v76 = vld [vmem:[#allocation2 + $0x18] sm:$0xf]
    %v77 = vld [vmem:[#allocation2 + $0x1c] sm:$0xf]
    %v78 = vld [vmem:[#allocation2 + $0x20] sm:$0xf]
    %v79 = vld [vmem:[#allocation2 + $0x24] sm:$0xf]
    %v80 = vld [vmem:[#allocation2 + $0x28] sm:$0xf]
    %v81 = vld [vmem:[#allocation2 + $0x2c] sm:$0xf]
    %v82 = vld [vmem:[#allocation2 + $0x30] sm:$0xf]
    %v83 = vld [vmem:[#allocation2 + $0x34] sm:$0xf]
    %v84 = vld [vmem:[#allocation2 + $0x38] sm:$0xf]
    %v85 = vld [vmem:[#allocation2 + $0x3c] sm:$0xf]
    %v86 = vld [vmem:[%s2] sm:$0x1]
    %v88 = vlaneseq
    %v89 = vshrl.u32 %v88, 7
    %v90 = vsub.s32 0, %v89
    %v91 = vrot.slane %v86, %v90
    %v95 = vunpack.c.l.b16 %v68
    %v96 = vunpack.c.l.b16 %v69
    %v97 = vpack.c.b16 %v96, %v95
    %v115 = vunpack.c.l.b16 %v70
    %v116 = vunpack.c.l.b16 %v71
    %v117 = vunpack.c.l.b16 %v72
    %v118 = vunpack.c.l.b16 %v73
    %v119 = vunpack.c.l.b16 %v74
    %v120 = vunpack.c.l.b16 %v75
    %v121 = vunpack.c.l.b16 %v76
    %v122 = vunpack.c.l.b16 %v77
    %v123 = vunpack.c.l.b16 %v78
    %v124 = vunpack.c.l.b16 %v79
    %v125 = vunpack.c.l.b16 %v80
    %v126 = vunpack.c.l.b16 %v81
    %v127 = vunpack.c.l.b16 %v82
    %v128 = vunpack.c.l.b16 %v83
    %v129 = vunpack.c.l.b16 %v84
    %v130 = vunpack.c.l.b16 %v85
    %v131 = vpack.c.b16 %v116, %v115
    %v132 = vpack.c.b16 %v118, %v117
    %v133 = vpack.c.b16 %v120, %v119
    %v134 = vpack.c.b16 %v122, %v121
    %v135 = vpack.c.b16 %v124, %v123
    %v136 = vpack.c.b16 %v126, %v125
    %v137 = vpack.c.b16 %v128, %v127
    %v138 = vpack.c.b16 %v130, %v129
    %147 = vmatprep.subr.bf16.mxu0 0
    %148 = vmatpush1.bf16.msra.mxu0 %v131
    %149 = vmatprep.subr.bf16.mxu0 0
    %150 = vmatpush1.bf16.msra.mxu0 %v132
    %151 = vmatprep.subr.bf16.mxu0 0
    %152 = vmatpush1.bf16.msra.mxu0 %v133
    %153 = vmatprep.subr.bf16.mxu0 0
    %154 = vmatpush1.bf16.msra.mxu0 %v134
    %155 = vmatprep.subr.bf16.mxu0 0
    %156 = vmatpush1.bf16.msra.mxu0 %v135
    %157 = vmatprep.subr.bf16.mxu0 0
    %158 = vmatpush1.bf16.msra.mxu0 %v136
    %159 = vmatprep.subr.bf16.mxu0 0
    %160 = vmatpush1.bf16.msra.mxu0 %v137
    %161 = vmatprep.subr.bf16.mxu0 0
    %162 = vmatpush1.bf16.msra.mxu0 %v138
    %163 = vmatprep.subr.bf16.mxu0 0
    %164 = vmatpush1.bf16.msra.mxu0 0
    %165 = vmatprep.subr.bf16.mxu0 0
    %166 = vmatpush1.bf16.msra.mxu0 0
    %167 = vmatprep.subr.bf16.mxu0 0
    %168 = vmatpush1.bf16.msra.mxu0 0
    %169 = vmatprep.subr.bf16.mxu0 0
    %170 = vmatpush1.bf16.msra.mxu0 0
    %171 = vmatprep.subr.bf16.mxu0 0
    %172 = vmatpush1.bf16.msra.mxu0 0
    %173 = vmatprep.subr.bf16.mxu0 0
    %174 = vmatpush1.bf16.msra.mxu0 0
    %175 = vmatprep.subr.bf16.mxu0 0
    %176 = vmatpush1.bf16.msra.mxu0 0
    %177 = vmatprep.subr.bf16.mxu0 0
    %178 = vmatpush1.bf16.msra.mxu0 0
    %179 = vmatprep.mubr.bf16.mxu0 0
    %180 = vmatmul.mubr.bf16.gmra.mrb[0].mxu0 %v97
    %v181 = vpop.f32.mrb[0].mxu0
    %v182 = vadd.f32 %v91, %v181
    %v183 = vpop.f32.mrb[0].mxu0
    %v184 = vpop.f32.mrb[0].mxu0
    %v185 = vadd.f32 %v91, %v184
    %v186 = vpop.f32.mrb[0].mxu0
    %187 = vdwg.mxu0
    %v188 = vmax.f32 %v182, 0.0
    %v189 = vmax.f32 %v185, 0.0
    %v190 = vpack.c.bf16 %v189, %v188
    %v191 = vld [vmem:[#allocation4] sm:$0xf]
    %v192 = vld [vmem:[#allocation4 + $0x4] sm:$0xf]
    %v193 = vld [vmem:[#allocation4 + $0x8] sm:$0xf]
    %v194 = vld [vmem:[#allocation4 + $0xc] sm:$0xf]
    %v195 = vld [vmem:[#allocation4 + $0x10] sm:$0xf]
    %v196 = vld [vmem:[#allocation4 + $0x14] sm:$0xf]
    %v197 = vld [vmem:[#allocation4 + $0x18] sm:$0xf]
    %v198 = vld [vmem:[#allocation4 + $0x1c] sm:$0xf]
    %v199 = vld [vmem:[#allocation4 + $0x20] sm:$0xf]
    %v200 = vld [vmem:[#allocation4 + $0x24] sm:$0xf]
    %v201 = vld [vmem:[#allocation4 + $0x28] sm:$0xf]
    %v202 = vld [vmem:[#allocation4 + $0x2c] sm:$0xf]
    %v203 = vld [vmem:[#allocation4 + $0x30] sm:$0xf]
    %v204 = vld [vmem:[#allocation4 + $0x34] sm:$0xf]
    %v205 = vld [vmem:[#allocation4 + $0x38] sm:$0xf]
    %v206 = vld [vmem:[#allocation4 + $0x3c] sm:$0xf]
    %v207 = vld [vmem:[%s4] sm:$0x1]
    %v209 = vlaneseq
    %v210 = vshrl.u32 %v209, 7
    %v211 = vsub.s32 0, %v210
    %v212 = vrot.slane %v207, %v211
    %v230 = vunpack.c.l.b16 %v191
    %v231 = vunpack.c.l.b16 %v192
    %v232 = vunpack.c.l.b16 %v193
    %v233 = vunpack.c.l.b16 %v194
    %v234 = vunpack.c.l.b16 %v195
    %v235 = vunpack.c.l.b16 %v196
    %v236 = vunpack.c.l.b16 %v197
    %v237 = vunpack.c.l.b16 %v198
    %v238 = vunpack.c.l.b16 %v199
    %v239 = vunpack.c.l.b16 %v200
    %v240 = vunpack.c.l.b16 %v201
    %v241 = vunpack.c.l.b16 %v202
    %v242 = vunpack.c.l.b16 %v203
    %v243 = vunpack.c.l.b16 %v204
    %v244 = vunpack.c.l.b16 %v205
    %v245 = vunpack.c.l.b16 %v206
    %v246 = vpack.c.b16 %v231, %v230
    %v247 = vpack.c.b16 %v233, %v232
    %v248 = vpack.c.b16 %v235, %v234
    %v249 = vpack.c.b16 %v237, %v236
    %v250 = vpack.c.b16 %v239, %v238
    %v251 = vpack.c.b16 %v241, %v240
    %v252 = vpack.c.b16 %v243, %v242
    %v253 = vpack.c.b16 %v245, %v244
    %262 = vmatprep.subr.bf16.mxu0 0
    %263 = vmatpush1.bf16.msra.mxu0 %v246
    %264 = vmatprep.subr.bf16.mxu0 0
    %265 = vmatpush1.bf16.msra.mxu0 %v247
    %266 = vmatprep.subr.bf16.mxu0 0
    %267 = vmatpush1.bf16.msra.mxu0 %v248
    %268 = vmatprep.subr.bf16.mxu0 0
    %269 = vmatpush1.bf16.msra.mxu0 %v249
    %270 = vmatprep.subr.bf16.mxu0 0
    %271 = vmatpush1.bf16.msra.mxu0 %v250
    %272 = vmatprep.subr.bf16.mxu0 0
    %273 = vmatpush1.bf16.msra.mxu0 %v251
    %274 = vmatprep.subr.bf16.mxu0 0
    %275 = vmatpush1.bf16.msra.mxu0 %v252
    %276 = vmatprep.subr.bf16.mxu0 0
    %277 = vmatpush1.bf16.msra.mxu0 %v253
    %278 = vmatprep.subr.bf16.mxu0 0
    %279 = vmatpush1.bf16.msra.mxu0 0
    %280 = vmatprep.subr.bf16.mxu0 0
    %281 = vmatpush1.bf16.msra.mxu0 0
    %282 = vmatprep.subr.bf16.mxu0 0
    %283 = vmatpush1.bf16.msra.mxu0 0
    %284 = vmatprep.subr.bf16.mxu0 0
    %285 = vmatpush1.bf16.msra.mxu0 0
    %286 = vmatprep.subr.bf16.mxu0 0
    %287 = vmatpush1.bf16.msra.mxu0 0
    %288 = vmatprep.subr.bf16.mxu0 0
    %289 = vmatpush1.bf16.msra.mxu0 0
    %290 = vmatprep.subr.bf16.mxu0 0
    %291 = vmatpush1.bf16.msra.mxu0 0
    %292 = vmatprep.subr.bf16.mxu0 0
    %293 = vmatpush1.bf16.msra.mxu0 0
    %294 = vmatprep.mubr.bf16.mxu0 0
    %295 = vmatmul.mubr.bf16.gmra.mrb[0].mxu0 %v190
    %v296 = vpop.f32.mrb[0].mxu0
    %v297 = vadd.f32 %v212, %v296
    %v298 = vpop.f32.mrb[0].mxu0
    %v299 = vpop.f32.mrb[0].mxu0
    %v300 = vadd.f32 %v212, %v299
    %v301 = vpop.f32.mrb[0].mxu0
    %302 = vdwg.mxu0
    %v303 = vmax.f32 %v297, 0.0
    %v304 = vmax.f32 %v300, 0.0
    %v305 = vpack.c.bf16 %v304, %v303
    %v306 = vld [vmem:[#allocation6] sm:$0xf]
    %v307 = vld [vmem:[#allocation6 + $0x4] sm:$0xf]
    %v308 = vld [vmem:[#allocation6 + $0x8] sm:$0xf]
    %v309 = vld [vmem:[#allocation6 + $0xc] sm:$0xf]
    %v310 = vld [vmem:[#allocation6 + $0x10] sm:$0xf]
    %v311 = vld [vmem:[#allocation6 + $0x14] sm:$0xf]
    %v312 = vld [vmem:[#allocation6 + $0x18] sm:$0xf]
    %v313 = vld [vmem:[#allocation6 + $0x1c] sm:$0xf]
    %v314 = vld [vmem:[#allocation6 + $0x20] sm:$0xf]
    %v315 = vld [vmem:[#allocation6 + $0x24] sm:$0xf]
    %v316 = vld [vmem:[#allocation6 + $0x28] sm:$0xf]
    %v317 = vld [vmem:[#allocation6 + $0x2c] sm:$0xf]
    %v318 = vld [vmem:[#allocation6 + $0x30] sm:$0xf]
    %v319 = vld [vmem:[#allocation6 + $0x34] sm:$0xf]
    %v320 = vld [vmem:[#allocation6 + $0x38] sm:$0xf]
    %v321 = vld [vmem:[#allocation6 + $0x3c] sm:$0xf]
    %v322 = vld [vmem:[%s6] sm:$0x1]
    %v324 = vlaneseq
    %v325 = vshrl.u32 %v324, 7
    %v326 = vsub.s32 0, %v325
    %v327 = vrot.slane %v322, %v326
    %v345 = vunpack.c.l.b16 %v306
    %v346 = vunpack.c.l.b16 %v307
    %v347 = vunpack.c.l.b16 %v308
    %v348 = vunpack.c.l.b16 %v309
    %v349 = vunpack.c.l.b16 %v310
    %v350 = vunpack.c.l.b16 %v311
    %v351 = vunpack.c.l.b16 %v312
    %v352 = vunpack.c.l.b16 %v313
    %v353 = vunpack.c.l.b16 %v314
    %v354 = vunpack.c.l.b16 %v315
    %v355 = vunpack.c.l.b16 %v316
    %v356 = vunpack.c.l.b16 %v317
    %v357 = vunpack.c.l.b16 %v318
    %v358 = vunpack.c.l.b16 %v319
    %v359 = vunpack.c.l.b16 %v320
    %v360 = vunpack.c.l.b16 %v321
    %v361 = vpack.c.b16 %v346, %v345
    %v362 = vpack.c.b16 %v348, %v347
    %v363 = vpack.c.b16 %v350, %v349
    %v364 = vpack.c.b16 %v352, %v351
    %v365 = vpack.c.b16 %v354, %v353
    %v366 = vpack.c.b16 %v356, %v355
    %v367 = vpack.c.b16 %v358, %v357
    %v368 = vpack.c.b16 %v360, %v359
    %377 = vmatprep.subr.bf16.mxu0 0
    %378 = vmatpush1.bf16.msra.mxu0 %v361
    %379 = vmatprep.subr.bf16.mxu0 0
    %380 = vmatpush1.bf16.msra.mxu0 %v362
    %381 = vmatprep.subr.bf16.mxu0 0
    %382 = vmatpush1.bf16.msra.mxu0 %v363
    %383 = vmatprep.subr.bf16.mxu0 0
    %384 = vmatpush1.bf16.msra.mxu0 %v364
    %385 = vmatprep.subr.bf16.mxu0 0
    %386 = vmatpush1.bf16.msra.mxu0 %v365
    %387 = vmatprep.subr.bf16.mxu0 0
    %388 = vmatpush1.bf16.msra.mxu0 %v366
    %389 = vmatprep.subr.bf16.mxu0 0
    %390 = vmatpush1.bf16.msra.mxu0 %v367
    %391 = vmatprep.subr.bf16.mxu0 0
    %392 = vmatpush1.bf16.msra.mxu0 %v368
    %393 = vmatprep.subr.bf16.mxu0 0
    %394 = vmatpush1.bf16.msra.mxu0 0
    %395 = vmatprep.subr.bf16.mxu0 0
    %396 = vmatpush1.bf16.msra.mxu0 0
    %397 = vmatprep.subr.bf16.mxu0 0
    %398 = vmatpush1.bf16.msra.mxu0 0
    %399 = vmatprep.subr.bf16.mxu0 0
    %400 = vmatpush1.bf16.msra.mxu0 0
    %401 = vmatprep.subr.bf16.mxu0 0
    %402 = vmatpush1.bf16.msra.mxu0 0
    %403 = vmatprep.subr.bf16.mxu0 0
    %404 = vmatpush1.bf16.msra.mxu0 0
    %405 = vmatprep.subr.bf16.mxu0 0
    %406 = vmatpush1.bf16.msra.mxu0 0
    %407 = vmatprep.subr.bf16.mxu0 0
    %408 = vmatpush1.bf16.msra.mxu0 0
    %409 = vmatprep.mubr.bf16.mxu0 0
    %410 = vmatmul.mubr.bf16.gmra.mrb[0].mxu0 %v305
    %v411 = vpop.f32.mrb[0].mxu0
    %v412 = vadd.f32 %v327, %v411
    %v413 = vpop.f32.mrb[0].mxu0
    %v414 = vpop.f32.mrb[0].mxu0
    %v415 = vadd.f32 %v327, %v414
    %v416 = vpop.f32.mrb[0].mxu0
    %417 = vdwg.mxu0
    %418 = vst [vmem:[%s7] sm:$0xff] %v412
    %419 = vst [vmem:[%s7 + $0x8] sm:$0xff] %v415
    // Predicated region
    $region42: #{_fused_mlp_impl.1} parent=1 // pred_check
      _
    $region43: #{_fused_mlp_impl.1} parent=1 // pred_check_branch
      %421 = sbr.rel (0) target = $region45
    $region44: #{_fused_mlp_impl.1} parent=1 // pred_region
      _
    $region45: #{_fused_mlp_impl.1} parent=1 // pred_fallthru
      _
    // Predicated region
    $region46: #{_fused_mlp_impl.1} parent=1 // pred_check
      _
    $region47: #{_fused_mlp_impl.1} parent=1 // pred_check_branch
      %423 = sbr.rel (0) target = $region49
    $region48: #{_fused_mlp_impl.1} parent=1 // pred_region
      _
    $region49: #{_fused_mlp_impl.1} parent=1 // pred_fallthru
      _
    %424 = vsyncpa [#allocation3], 1
    %425 = vsyncpa [#allocation5], 1

</llo_original>
